<compile_context>
chip_gen: v6e
topology: v6e:2x2x1
jax: 0.10.0
libtpu: 0.0.40
codegen_flags: <defaults>
</compile_context>

<pallas_src>
import functools

import jax
import jax.numpy as jnp
from jax.experimental import pallas as pl
from jax.experimental.pallas import tpu as pltpu

K = 7                      # spatial kernel size of the gate conv
PAD = (K - 1) // 2         # 3
EPS = 1e-5                 # InstanceNorm3d default eps


def _tpu_vmem_capacity_bytes():
    try:
        return int(pltpu.get_tpu_info().vmem_capacity_bytes)
    except Exception:
        return 128 * 1024 * 1024


_VMEM_CAP = _tpu_vmem_capacity_bytes()
# Leave headroom for Mosaic internal scratch + double buffering (never hand the
# kernel all of v7x's 64 MiB; use most of v5e/v6e's 128 MiB).
_VMEM_LIMIT = min((_VMEM_CAP * 3) // 4, 112 * 1024 * 1024)
if _VMEM_CAP <= 64 * 1024 * 1024:            # v7x-class (64 MiB / TC)
    _POOL_BLOCK_BUDGET = 4 * 1024 * 1024
    _GATE_BLOCK_BUDGET = 2 * 1024 * 1024
else:                                        # v5e / v6e (128 MiB)
    _POOL_BLOCK_BUDGET = 8 * 1024 * 1024
    _GATE_BLOCK_BUDGET = 4 * 1024 * 1024
_LANE_TILE_CAP = 2048                        # lane-axis width of the pooling view
_GATE_MAX_TS = 32768                         # lane-axis tile cap for the gate pass


def _pick_tile(n, cap, mult):
    """Largest divisor d of n with d <= cap and (d % mult == 0 or d == n)."""
    cap = max(1, min(n, cap))
    for d in range(cap, 0, -1):
        if n % d == 0 and (d % mult == 0 or d == n):
            return d
    return n


# --------------------------- kernel A1: channel pooling ---------------------------
def _pool_kernel(x_ref, p_ref, *, inv_c):
    """Grid (N, R_tiles, C_tiles); c is last ("arbitrary") -> p_ref stays resident.

    x_ref : VMEM (1, tc, tr, L)  lane-dense channel tile of x
    p_ref : VMEM (1, 2, tr, L)   running [channel max, channel sum -> mean]
    """
    c = pl.program_id(2)
    xblk = x_ref[0].astype(jnp.float32)          # (tc, tr, L)
    blk_max = jnp.max(xblk, axis=0)              # (tr, L); channel is a major axis -> VPU
    blk_sum = jnp.sum(xblk, axis=0)

    @pl.when(c == 0)
    def _():
        p_ref[0, 0] = blk_max
        p_ref[0, 1] = blk_sum

    @pl.when(c > 0)
    def _():
        p_ref[0, 0] = jnp.maximum(p_ref[0, 0], blk_max)
        p_ref[0, 1] = p_ref[0, 1] + blk_sum

    @pl.when(c == pl.num_programs(2) - 1)
    def _():
        p_ref[0, 1] = p_ref[0, 1] * inv_c        # channel sum -> channel mean


# ----------------- kernel A2: 7^3 conv + InstanceNorm + sigmoid -------------------
def _conv_norm_kernel(w_ref, gb_ref, p_ref, o_ref, pad_ref, *, D, H, W):
    """Grid (N,). Per-sample gate-map computation.

    w_ref   : SMEM (2*K*K*K,) f32  flattened Conv3d weight [out=1, in=2, kd, kh, kw]
    gb_ref  : SMEM (2,) f32        [gamma, beta] of InstanceNorm3d(1, affine=True)
    p_ref   : VMEM (1, 2, D, H, W) pooled [max, mean] maps
    o_ref   : VMEM (1, D, H, W)    gate map
    pad_ref : VMEM (2, Dp, Hp, Wp) zero-padded pooled maps (scratch)
    """
    Dp, Hp, Wp = D + 2 * PAD, H + 2 * PAD, W + 2 * PAD
    pooled = p_ref[0].astype(jnp.float32)                      # (2, D, H, W)

    # Zero only the 6 halo slabs (not the whole buffer), then write the interior.
    for ci in range(2):
        pad_ref[ci, 0:PAD] = jnp.zeros((PAD, Hp, Wp), jnp.float32)
        pad_ref[ci, PAD + D:Dp] = jnp.zeros((PAD, Hp, Wp), jnp.float32)
        pad_ref[ci, PAD:PAD + D, 0:PAD] = jnp.zeros((D, PAD, Wp), jnp.float32)
        pad_ref[ci, PAD:PAD + D, PAD + H:Hp] = jnp.zeros((D, PAD, Wp), jnp.float32)
        pad_ref[ci, PAD:PAD + D, PAD:PAD + H, 0:PAD] = jnp.zeros((D, H, PAD), jnp.float32)
        pad_ref[ci, PAD:PAD + D, PAD:PAD + H, PAD + W:Wp] = jnp.zeros((D, H, PAD), jnp.float32)
        pad_ref[ci, PAD:PAD + D, PAD:PAD + H, PAD:PAD + W] = pooled[ci]

    # Conv3d(2 -> 1, kernel=7, stride=1, padding=3, bias=False).
    # Load the padded buffer once; hoist the 7 kw lane shifts out of the kd/kh
    # loops (7 lane relayouts instead of 49); 4 partial accumulators break the
    # 686-deep serial FMA dependency chain.
    # TODO(synk): move the conv taps onto the MXU (banded shift matrix / im2col)
    # and spatially tile this kernel with halo'd BlockSpecs for large volumes.
    padv = pad_ref[...]                                        # (2, Dp, Hp, Wp)
    wshift = [padv[:, :, :, kw:kw + W] for kw in range(K)]     # 7 x (2, Dp, Hp, W)
    accs = [jnp.zeros((D, H, W), jnp.float32) for _ in range(4)]
    t = 0
    for kw in range(K):
        sw = wshift[kw]
        for kh in range(K):
            win = sw[:, :, kh:kh + H, :]                       # (2, Dp, H, W)
            for ci in range(2):
                for kd in range(K):
                    widx = ((ci * K + kd) * K + kh) * K + kw   # flat [0, ci, kd, kh, kw]
                    accs[t % 4] = accs[t % 4] + win[ci, kd:kd + D] * w_ref[widx]
                    t += 1
    conv = (accs[0] + accs[1]) + (accs[2] + accs[3])           # (D, H, W)

    # InstanceNorm3d(1, affine): centered (two-pass) biased variance, matching PyTorch.
    inv_n = 1.0 / float(D * H * W)
    mu = jnp.sum(conv) * inv_n
    cent = conv - mu
    var = jnp.sum(cent * cent) * inv_n
    normed = cent * (gb_ref[0] * jax.lax.rsqrt(var + EPS)) + gb_ref[1]

    # Exact sigmoid via a single EUP tanh (relu=False in BasicConv).
    gate = 0.5 * jnp.tanh(0.5 * normed) + 0.5
    o_ref[0] = gate.astype(o_ref.dtype)


# --------------------------- kernel B: elementwise gating -------------------------
def _gate_kernel(x_ref, s_ref, o_ref):
    """Lane-dense gating: out = x * scale, computed in x's native dtype."""
    s = s_ref[0].astype(o_ref.dtype)               # (1, ts)
    o_ref[0] = x_ref[0] * s                        # (tcb, ts) * (1, ts) broadcast


# ------------------------------------ wrapper -------------------------------------
def spatial_gate_fix_scale(x, conv_w, gamma, beta):
    """x: (N, C, D, H, W); conv_w: (1, 2, 7, 7, 7); gamma/beta: scalars or (1,) arrays."""
    N, C, D, H, W = x.shape
    DHW = D * H * W
    Dp, Hp, Wp = D + 2 * PAD, H + 2 * PAD, W + 2 * PAD
    itemsize = jnp.dtype(x.dtype).itemsize

    w_flat = jnp.asarray(conv_w, jnp.float32).reshape(-1)                 # (2*K^3,)
    gb = jnp.concatenate([jnp.asarray(gamma, jnp.float32).reshape(1),
                          jnp.asarray(beta, jnp.float32).reshape(1)])     # (2,)

    # ---------------- kernel A1: lane-dense channel pooling ----------------
    L = _pick_tile(DHW, _LANE_TILE_CAP, 128)       # lane width (mult of 128 when possible)
    R = DHW // L
    x4 = x.reshape(N, C, R, L)

    elems = max(1, _POOL_BLOCK_BUDGET // itemsize)
    tr = _pick_tile(R, max(1, elems // (C * L)), 8)
    tc = _pick_tile(C, max(1, elems // (tr * L)), 1)

    pooled = pl.pallas_call(
        functools.partial(_pool_kernel, inv_c=1.0 / C),
        out_shape=jax.ShapeDtypeStruct((N, 2, R, L), jnp.float32),
        grid=(N, R // tr, C // tc),
        in_specs=[pl.BlockSpec((1, tc, tr, L), lambda n, r, c: (n, c, r, 0))],
        out_specs=pl.BlockSpec((1, 2, tr, L), lambda n, r, c: (n, 0, r, 0)),
        compiler_params=pltpu.CompilerParams(
            dimension_semantics=("parallel", "parallel", "arbitrary"),
            vmem_limit_bytes=_VMEM_LIMIT,
        ),
        cost_estimate=pl.CostEstimate(
            flops=2 * N * C * DHW,
            transcendentals=0,
            bytes_accessed=N * C * DHW * itemsize + 2 * N * DHW * 4,
        ),
    )(x4)

    # ---------------- kernel A2: conv + InstanceNorm + sigmoid ----------------
    p5 = pooled.reshape(N, 2, D, H, W)

    scale = pl.pallas_call(
        functools.partial(_conv_norm_kernel, D=D, H=H, W=W),
        out_shape=jax.ShapeDtypeStruct((N, D, H, W), jnp.float32),
        grid_spec=pltpu.PrefetchScalarGridSpec(
            num_scalar_prefetch=0,
            grid=(N,),
            in_specs=[
                pl.BlockSpec(memory_space=pltpu.MemorySpace.SMEM),        # conv weights
                pl.BlockSpec(memory_space=pltpu.MemorySpace.SMEM),        # [gamma, beta]
                pl.BlockSpec((1, 2, D, H, W), lambda n: (n, 0, 0, 0, 0)),
            ],
            out_specs=pl.BlockSpec((1, D, H, W), lambda n: (n, 0, 0, 0)),
            scratch_shapes=[pltpu.VMEM((2, Dp, Hp, Wp), jnp.float32)],
        ),
        compiler_params=pltpu.CompilerParams(
            dimension_semantics=("parallel",),
            vmem_limit_bytes=_VMEM_LIMIT,
        ),
        cost_estimate=pl.CostEstimate(
            flops=N * DHW * (4 * K * K * K + 8),
            transcendentals=N * DHW,
            bytes_accessed=3 * N * DHW * 4,
        ),
    )(w_flat, gb, p5)

    # ---------------- kernel B: lane-dense gating (out = x * scale) ----------------
    xf = x.reshape(N, C, DHW)              # free metadata reshape; last axis lane-dense
    sf = scale.reshape(N, 1, DHW)

    ts = _pick_tile(DHW, _GATE_MAX_TS, 128)
    tcb = _pick_tile(C, max(1, _GATE_BLOCK_BUDGET // (ts * itemsize)), 8)

    out = pl.pallas_call(
        _gate_kernel,
        out_shape=jax.ShapeDtypeStruct((N, C, DHW), x.dtype),
        grid=(N, DHW // ts, C // tcb),     # c innermost -> scale tile is not re-fetched
        in_specs=[
            pl.BlockSpec((1, tcb, ts), lambda n, s, c: (n, c, s)),
            pl.BlockSpec((1, 1, ts), lambda n, s, c: (n, 0, s)),
        ],
        out_specs=pl.BlockSpec((1, tcb, ts), lambda n, s, c: (n, c, s)),
        compiler_params=pltpu.CompilerParams(
            dimension_semantics=("parallel", "parallel", "parallel"),
            vmem_limit_bytes=_VMEM_LIMIT,
        ),
        cost_estimate=pl.CostEstimate(
            flops=N * C * DHW,
            transcendentals=0,
            bytes_accessed=2 * N * C * DHW * itemsize + N * DHW * 4,
        ),
    )(xf, sf)
    return out.reshape(N, C, D, H, W)


def _reference(x, conv_w, gamma, beta):
    """Pure-JAX reference for the same forward pass."""
    x32 = x.astype(jnp.float32)
    x_max = jnp.max(x32, axis=1, keepdims=True)
    x_mean = jnp.mean(x32, axis=1, keepdims=True)
    pooled = jnp.concatenate([x_max, x_mean], axis=1)            # (N, 2, D, H, W)
    conv = jax.lax.conv_general_dilated(
        pooled, jnp.asarray(conv_w, jnp.float32),
        window_strides=(1, 1, 1), padding=[(PAD, PAD)] * 3,
        dimension_numbers=("NCDHW", "OIDHW", "NCDHW"))           # (N, 1, D, H, W)
    mu = jnp.mean(conv, axis=(2, 3, 4), keepdims=True)
    var = jnp.mean((conv - mu) ** 2, axis=(2, 3, 4), keepdims=True)
    normed = (conv - mu) * jax.lax.rsqrt(var + EPS) * gamma + beta
    scale = jax.nn.sigmoid(normed)
    return x32 * scale


if __name__ == "__main__":
    # Small, forward-consistent shapes: N=2, C=4, D=H=W=8.
    N, C, D, H, W = 2, 4, 8, 8, 8

    key = jax.random.PRNGKey(0)
    kx, kw = jax.random.split(key)
    x = jax.random.normal(kx, (N, C, D, H, W), dtype=jnp.float32)
    # Deterministic synthetic Conv3d weight (shape from BasicConv(2, 1, 7)); bias=False.
    conv_w = jax.random.normal(kw, (1, 2, K, K, K), dtype=jnp.float32) * 0.05
    # InstanceNorm3d(1, affine=True) default init: weight=1, bias=0.
    gamma, beta = 1.0, 0.0

    out = spatial_gate_fix_scale(x, conv_w, gamma, beta)
    out = jax.block_until_ready(out)

    ref = _reference(x, conv_w, gamma, beta)
    assert out.shape == x.shape
    max_err = float(jnp.max(jnp.abs(out - ref)))
    # Exact sigmoid + centered InstanceNorm variance -> tight f32 tolerance.
    if max_err > 1e-3:
        raise AssertionError(f"Pallas kernel mismatch vs reference: max err {max_err:e}")

    print("KERNEL_OK")
</pallas_src>

<mosaic_0001>
module attributes {stable_mosaic.version = 11 : i64} {
  func.func @_pool_kernel(%arg0: i32, %arg1: i32, %arg2: i32, %arg3: memref<1x4x1x512xf32, #tpu.memory_space<vmem>>, %arg4: memref<1x2x1x512xf32, #tpu.memory_space<vmem>>) attributes {dimension_semantics = [#tpu.dimension_semantics<parallel>, #tpu.dimension_semantics<parallel>, #tpu.dimension_semantics<arbitrary>], iteration_bounds = array<i64: 2, 1, 1>, scalar_prefetch = 0 : i64, scratch_operands = 0 : i64, tpu.core_type = #tpu.core_type<tc>, window_params = [{transform_indices = @transform_0, window_bounds = array<i64: 1, 4, 1, 512>}, {transform_indices = @transform_1, window_bounds = array<i64: 1, 2, 1, 512>}]} {
    %c0 = arith.constant 0 : index
    %c0_0 = arith.constant 0 : index
    %c0_1 = arith.constant 0 : index
    %c0_2 = arith.constant 0 : index
    %0 = vector.load %arg3[%c0, %c0_0, %c0_1, %c0_2] : memref<1x4x1x512xf32, #tpu.memory_space<vmem>>, vector<1x4x1x512xf32>
    %1 = vector.shape_cast %0 : vector<1x4x1x512xf32> to vector<4x1x512xf32>
    %cst = arith.constant dense<0xFF800000> : vector<1x512xf32>
    %2 = vector.multi_reduction <maximumf>, %1, %cst [0] : vector<4x1x512xf32> to vector<1x512xf32>
    %cst_3 = arith.constant dense<0.000000e+00> : vector<1x512xf32>
    %3 = vector.multi_reduction <add>, %1, %cst_3 [0] : vector<4x1x512xf32> to vector<1x512xf32>
    %c0_i32 = arith.constant 0 : i32
    %4 = arith.cmpi eq, %arg2, %c0_i32 : i32
    %5 = arith.extui %4 : i1 to i32
    %c0_i32_4 = arith.constant 0 : i32
    %6 = arith.cmpi ne, %5, %c0_i32_4 : i32
    scf.if %6 {
      %c0_9 = arith.constant 0 : index
      %c0_10 = arith.constant 0 : index
      %c0_11 = arith.constant 0 : index
      %c0_12 = arith.constant 0 : index
      %13 = vector.load %arg4[%c0_9, %c0_10, %c0_11, %c0_12] : memref<1x2x1x512xf32, #tpu.memory_space<vmem>>, vector<1x1x1x512xf32>
      %14 = vector.shape_cast %13 : vector<1x1x1x512xf32> to vector<1x512xf32>
      %15 = vector.shape_cast %2 : vector<1x512xf32> to vector<1x1x1x512xf32>
      tpu.vector_store %arg4[%c0_9, %c0_10, %c0_11, %c0_12], %15 {strides = array<i32>} : memref<1x2x1x512xf32, #tpu.memory_space<vmem>>, vector<1x1x1x512xf32>,
      %c0_13 = arith.constant 0 : index
      %c1 = arith.constant 1 : index
      %c0_14 = arith.constant 0 : index
      %c0_15 = arith.constant 0 : index
      %16 = vector.load %arg4[%c0_13, %c1, %c0_14, %c0_15] : memref<1x2x1x512xf32, #tpu.memory_space<vmem>>, vector<1x1x1x512xf32>
      %17 = vector.shape_cast %16 : vector<1x1x1x512xf32> to vector<1x512xf32>
      %18 = vector.shape_cast %3 : vector<1x512xf32> to vector<1x1x1x512xf32>
      tpu.vector_store %arg4[%c0_13, %c1, %c0_14, %c0_15], %18 {strides = array<i32>} : memref<1x2x1x512xf32, #tpu.memory_space<vmem>>, vector<1x1x1x512xf32>,
    } else {
    }
    %c0_i32_5 = arith.constant 0 : i32
    %7 = arith.cmpi sgt, %arg2, %c0_i32_5 : i32
    %8 = arith.extui %7 : i1 to i32
    %c0_i32_6 = arith.constant 0 : i32
    %9 = arith.cmpi ne, %8, %c0_i32_6 : i32
    scf.if %9 {
      %c0_9 = arith.constant 0 : index
      %c0_10 = arith.constant 0 : index
      %c0_11 = arith.constant 0 : index
      %c0_12 = arith.constant 0 : index
      %13 = vector.load %arg4[%c0_9, %c0_10, %c0_11, %c0_12] : memref<1x2x1x512xf32, #tpu.memory_space<vmem>>, vector<1x1x1x512xf32>
      %14 = vector.shape_cast %13 : vector<1x1x1x512xf32> to vector<1x512xf32>
      %15 = arith.maximumf %14, %2 : vector<1x512xf32>
      %c0_13 = arith.constant 0 : index
      %c0_14 = arith.constant 0 : index
      %c0_15 = arith.constant 0 : index
      %c0_16 = arith.constant 0 : index
      %16 = vector.load %arg4[%c0_13, %c0_14, %c0_15, %c0_16] : memref<1x2x1x512xf32, #tpu.memory_space<vmem>>, vector<1x1x1x512xf32>
      %17 = vector.shape_cast %16 : vector<1x1x1x512xf32> to vector<1x512xf32>
      %18 = vector.shape_cast %15 : vector<1x512xf32> to vector<1x1x1x512xf32>
      tpu.vector_store %arg4[%c0_13, %c0_14, %c0_15, %c0_16], %18 {strides = array<i32>} : memref<1x2x1x512xf32, #tpu.memory_space<vmem>>, vector<1x1x1x512xf32>,
      %c0_17 = arith.constant 0 : index
      %c1 = arith.constant 1 : index
      %c0_18 = arith.constant 0 : index
      %c0_19 = arith.constant 0 : index
      %19 = vector.load %arg4[%c0_17, %c1, %c0_18, %c0_19] : memref<1x2x1x512xf32, #tpu.memory_space<vmem>>, vector<1x1x1x512xf32>
      %20 = vector.shape_cast %19 : vector<1x1x1x512xf32> to vector<1x512xf32>
      %21 = arith.addf %20, %3 : vector<1x512xf32>
      %c0_20 = arith.constant 0 : index
      %c1_21 = arith.constant 1 : index
      %c0_22 = arith.constant 0 : index
      %c0_23 = arith.constant 0 : index
      %22 = vector.load %arg4[%c0_20, %c1_21, %c0_22, %c0_23] : memref<1x2x1x512xf32, #tpu.memory_space<vmem>>, vector<1x1x1x512xf32>
      %23 = vector.shape_cast %22 : vector<1x1x1x512xf32> to vector<1x512xf32>
      %24 = vector.shape_cast %21 : vector<1x512xf32> to vector<1x1x1x512xf32>
      tpu.vector_store %arg4[%c0_20, %c1_21, %c0_22, %c0_23], %24 {strides = array<i32>} : memref<1x2x1x512xf32, #tpu.memory_space<vmem>>, vector<1x1x1x512xf32>,
    } else {
    }
    %c0_i32_7 = arith.constant 0 : i32
    %10 = arith.cmpi eq, %arg2, %c0_i32_7 : i32
    %11 = arith.extui %10 : i1 to i32
    %c0_i32_8 = arith.constant 0 : i32
    %12 = arith.cmpi ne, %11, %c0_i32_8 : i32
    scf.if %12 {
      %c0_9 = arith.constant 0 : index
      %c1 = arith.constant 1 : index
      %c0_10 = arith.constant 0 : index
      %c0_11 = arith.constant 0 : index
      %13 = vector.load %arg4[%c0_9, %c1, %c0_10, %c0_11] : memref<1x2x1x512xf32, #tpu.memory_space<vmem>>, vector<1x1x1x512xf32>
      %14 = vector.shape_cast %13 : vector<1x1x1x512xf32> to vector<1x512xf32>
      %cst_12 = arith.constant 2.500000e-01 : f32
      %15 = vector.broadcast %cst_12 : f32 to vector<1x512xf32>
      %16 = arith.mulf %14, %15 : vector<1x512xf32>
      %c0_13 = arith.constant 0 : index
      %c1_14 = arith.constant 1 : index
      %c0_15 = arith.constant 0 : index
      %c0_16 = arith.constant 0 : index
      %17 = vector.load %arg4[%c0_13, %c1_14, %c0_15, %c0_16] : memref<1x2x1x512xf32, #tpu.memory_space<vmem>>, vector<1x1x1x512xf32>
      %18 = vector.shape_cast %17 : vector<1x1x1x512xf32> to vector<1x512xf32>
      %19 = vector.shape_cast %16 : vector<1x512xf32> to vector<1x1x1x512xf32>
      tpu.vector_store %arg4[%c0_13, %c1_14, %c0_15, %c0_16], %19 {strides = array<i32>} : memref<1x2x1x512xf32, #tpu.memory_space<vmem>>, vector<1x1x1x512xf32>,
    } else {
    }
    return
  }
  func.func @transform_0(%arg0: i32, %arg1: i32, %arg2: i32) -> (i32, i32, i32, i32) {
    %c0_i32 = arith.constant 0 : i32
    %c0_i32_0 = arith.constant 0 : i32
    return %arg0, %arg2, %arg1, %c0_i32 : i32, i32, i32, i32
  }
  func.func @transform_1(%arg0: i32, %arg1: i32, %arg2: i32) -> (i32, i32, i32, i32) {
    %c0_i32 = arith.constant 0 : i32
    %c0_i32_0 = arith.constant 0 : i32
    %c0_i32_1 = arith.constant 0 : i32
    return %arg0, %c0_i32, %arg1, %c0_i32_0 : i32, i32, i32, i32
  }
}

</mosaic_0001>

<llo_original>
// kernel: tpu_custom_call.1
$region0: #{tpu_custom_call.1}
  #allocation0 [shape = 'u32[]', space=smem, size = 0x4, offset = 0x4, fixed_abs, tag = 'smem constant byte address 0x4 - core index']
  #allocation1 [shape = 'u32[144,128]{1,0:T(1,128)}', space=vmem, size = 0x12000, scoped, tag = 'internal scratch']
  %s0 = inlined_call_operand.hbm [shape: f32[2,4,1,512], index: 0, kind: input, shape index: {}]
  %s1 = inlined_call_operand.hbm [shape: f32[2,2,1,512], index: 1, kind: output, shape index: {}]
  %s2 = sld [smem:[#allocation0]]
  $region53: #{tpu_custom_call.1} parent=0
    _
  %s4 = ssub.s32 1, %s2
  %s5 = scalar_select 0, %s4, %s2
  $region1: #{tpu_custom_call.1} parent=0
    #allocation2 [shape = 'u8[16384]{0}', space=vmem, size = 0x4000, scoped, tag = 'input window, operand 0']
    #allocation3 [shape = 's32[2]{0}', space=sflag, size = 0x8, scoped, tag = 'scoped memory for tpu_custom_call.1']
    #allocation4 [shape = 's32[2]{0}', space=sflag, size = 0x8, scoped, tag = 'scoped memory for tpu_custom_call.1']
    #allocation5 [shape = 'u8[8192]{0}', space=vmem, size = 0x2000, scoped, tag = 'output window, operand 0']
    %6 = vsyncpa [#allocation3], 0
    %s7 = scalar_lea.sflag [#allocation3], 1
    %8 = vsyncpa %s7, 0
    %9 = vsyncpa [#allocation4], 0
    %s10 = scalar_lea.sflag [#allocation4], 1
    %11 = vsyncpa %s10, 0
    loop: start=0, step=1, limit=4
    $region2: #{tpu_custom_call.1} parent=1 // loop_pre_header
      _
    $region3: #{tpu_custom_call.1} parent=1 // loop_header
      %s13 = sphi 0, %s17
      %p14 = scmp.ge.s32.totalorder %s13, 4
      %s20 = sphi 0, %s39
      %s21 = sphi 0, %s35
      %s22 = sphi 0, %s31
      %s23 = sphi 0, %s20
      %s24 = sphi 0, %s21
      %s25 = sphi 0, %s22
      %s26 = sphi 0, %s23
      %s27 = sphi 0, %s24
      %s28 = sphi 0, %s25
      %s46 = sphi 0, %s48
      %s49 = sphi 0, %s46
      %s50 = sphi 0, %s49
      %s66 = sphi 0, %s50
      %s74 = sphi 0, %s76
      %s77 = sphi 0, %s74
      %s78 = sphi 0, %s77
      %s94 = sphi 0, %s78
    $region4: #{tpu_custom_call.1} parent=1 // loop_header_branch
      %16 = sbr.rel (%p14) target = $region8
    $region5: #{tpu_custom_call.1} parent=1 // loop_body
      %s18 = ssub.s32 %s13, 1
      %s19 = ssub.s32 %s13, 2
      %s29 = sadd.s32 1, %s22
      %p30 = scmp.ge.s32.totalorder %s29, 1
      %s31 = scalar_select %p30, 0, %s29
      %s32 = sadd.s32 1, %s21
      %s33 = scalar_select %p30, %s32, %s21
      %p34 = scmp.ge.s32.totalorder %s33, 1
      %s35 = scalar_select %p34, 0, %s33
      %s36 = sadd.s32 1, %s20
      %s37 = scalar_select %p34, %s36, %s20
      %p38 = scmp.ge.s32.totalorder %s37, 2
      %s39 = scalar_select %p38, 0, %s37
      %s40 = ssub.s32 %s20, %s39
      %s41 = ssub.s32 %s22, %s31
      %s42 = sor.u32 %s40, %s41
      %s43 = ssub.s32 %s21, %s35
      %s44 = sor.u32 %s42, %s43
      %p45 = scmp.eq.s32.totalorder %s44, 0
      %s47 = sadd.s32 %s46, 1
      %s48 = scalar_select %p45, %s46, %s47
      %p51 = pneg %p45
      %p52 = scmp.eq.s32.totalorder %s13, 1
      %p53 = por %p51, %p52
      %p54 = scmp.ne.s32.totalorder %s46, %s49
      %p55 = scmp.eq.s32.totalorder %s13, 0
      %p56 = por %p54, %p55
      %p57 = scmp.ne.s32.totalorder %s46, %s49
      %p58 = scmp.eq.s32.totalorder %s18, 1
      %p59 = por %p57, %p58
      %p60 = scmp.ne.s32.totalorder %s49, %s50
      %p61 = scmp.eq.s32.totalorder %s18, 0
      %p62 = por %p60, %p61
      %p63 = scmp.ne.s32.totalorder %s49, %s50
      %p64 = scmp.eq.s32.totalorder %s19, 1
      %p65 = por %p63, %p64
      %p67 = scmp.ne.s32.totalorder %s50, %s66
      %p68 = scmp.eq.s32.totalorder %s19, 0
      %p69 = por %p67, %p68
      %s70 = ssub.s32 %s20, %s39
      %s71 = ssub.s32 %s21, %s35
      %s72 = sor.u32 %s70, %s71
      %p73 = scmp.eq.s32.totalorder %s72, 0
      %s75 = sadd.s32 %s74, 1
      %s76 = scalar_select %p73, %s74, %s75
      %p79 = pneg %p73
      %p80 = scmp.eq.s32.totalorder %s13, 1
      %p81 = por %p79, %p80
      %p82 = scmp.ne.s32.totalorder %s74, %s77
      %p83 = scmp.eq.s32.totalorder %s13, 0
      %p84 = por %p82, %p83
      %p85 = scmp.ne.s32.totalorder %s74, %s77
      %p86 = scmp.eq.s32.totalorder %s18, 1
      %p87 = por %p85, %p86
      %p88 = scmp.ne.s32.totalorder %s77, %s78
      %p89 = scmp.eq.s32.totalorder %s18, 0
      %p90 = por %p88, %p89
      %p91 = scmp.ne.s32.totalorder %s77, %s78
      %p92 = scmp.eq.s32.totalorder %s19, 1
      %p93 = por %p91, %p92
      %p95 = scmp.ne.s32.totalorder %s78, %s94
      %p96 = scmp.eq.s32.totalorder %s19, 0
      %p97 = por %p95, %p96
      %p98 = scmp.le.s32.totalorder 1, %s13
      %p99 = scmp.lt.s32.totalorder %s13, 3
      %p100 = pnand %p98, %p99
      %p101 = pneg %p100
      // Predicated region
      $region9: #{tpu_custom_call.1} parent=5 // pred_check
        _
      $region10: #{tpu_custom_call.1} parent=5 // pred_check_branch
        %103 = sbr.rel (%p100) target = $region12
      $region11: #{tpu_custom_call.1} parent=5 // pred_region
        %s104 = ssub.s32 %s13, 1
      $region12: #{tpu_custom_call.1} parent=5 // pred_fallthru
        _
      %p105 = scmp.lt.s32.totalorder %s13, 2
      // Predicated region
      $region13: #{tpu_custom_call.1} parent=5 // pred_check
        %p106 = pneg %p105
      $region14: #{tpu_custom_call.1} parent=5 // pred_check_branch
        %108 = sbr.rel (%p106) target = $region16
      $region15: #{tpu_custom_call.1} parent=5 // pred_region
        // Predicated region
        $region17: #{tpu_custom_call.1} parent=15 // pred_check
          %p109 = pneg %p56
        $region18: #{tpu_custom_call.1} parent=15 // pred_check_branch
          %111 = sbr.rel (%p109) target = $region20
        $region19: #{tpu_custom_call.1} parent=15 // pred_region
          %s112 = sand.u32 %s46, 1
          %s113 = scalar_lea.sflag [#allocation3], %s112
          %s114 = sand.u32 %s46, 1
          %s115 = smul.addr %s114, 16
          %s116 = scalar_lea.vmem [#allocation2], %s115
          %s117 = smul.u32 4, %s22
          %s119 = ssub.s32 256, 256
          %120 = vsyncadd %s113, %s119
          %s121 = smul.addr %s21, 4
          %s122 = smul.addr %s117, 4
          %s123 = sadd.s32 %s121, %s122
          %s124 = smul.addr %s20, 16
          %s125 = sadd.s32 %s123, %s124
          %s126 = smul.addr %s125, 16
          %s127 = scalar_lea.hbm %s0, %s126
          %s128 = sshll.u32 %s116, 4
          %s129 = int_to_ptr.vmem [resolvable:$true] %s128
          %134 = dma.hbm_to_vmem [thread:$0]  %s127, 256, %s129, %s113, 64, 64, 4
        $region20: #{tpu_custom_call.1} parent=15 // pred_fallthru
          _
      $region16: #{tpu_custom_call.1} parent=5 // pred_fallthru
        _
      %p135 = scmp.le.s32.totalorder 1, %s13
      %p136 = scmp.lt.s32.totalorder %s13, 3
      %p137 = pnand %p135, %p136
      %p138 = pneg %p137
      // Predicated region
      $region21: #{tpu_custom_call.1} parent=5 // pred_check
        _
      $region22: #{tpu_custom_call.1} parent=5 // pred_check_branch
        %140 = sbr.rel (%p137) target = $region24
      $region23: #{tpu_custom_call.1} parent=5 // pred_region
        %s141 = ssub.s32 %s13, 1
        %s142 = sand.u32 %s49, 1
        %s143 = scalar_lea.sflag [#allocation3], %s142
        %s144 = sand.u32 %s49, 1
        %s145 = smul.addr %s144, 16
        %s146 = scalar_lea.vmem [#allocation2], %s145
        // Predicated region
        $region25: #{tpu_custom_call.1} parent=23 // pred_check
          %p147 = pneg %p62
        $region26: #{tpu_custom_call.1} parent=23 // pred_check_branch
          %149 = sbr.rel (%p147) target = $region28
        $region27: #{tpu_custom_call.1} parent=23 // pred_region
          %150 = dma.done %s143, 256
        $region28: #{tpu_custom_call.1} parent=23 // pred_fallthru
          _
        %s151 = sand.u32 %s49, 1
        %s152 = scalar_lea.sflag [#allocation3], %s151
        %s153 = sand.u32 %s49, 1
        %s154 = smul.addr %s153, 16
        %s155 = scalar_lea.vmem [#allocation2], %s154
        %p156 = pneg %p62
        %p157 = pneg %p59
        %p158 = pneg %p90
        %p159 = pneg %p87
        %s160 = sand.u32 %s77, 1
        %s161 = scalar_lea.sflag [#allocation4], %s160
        %s162 = sand.u32 %s77, 1
        %s163 = smul.addr %s162, 8
        %s164 = scalar_lea.vmem [#allocation5], %s163
        %s165 = smul.u32 4, %s25
        %v166 = vld [vmem:[%s146] sm:$0xf]
        %v167 = vld [vmem:[%s146 + $0x4] sm:$0xf]
        %v168 = vld [vmem:[%s146 + $0x8] sm:$0xf]
        %v169 = vld [vmem:[%s146 + $0xc] sm:$0xf]
        %v170 = vlaneseq
        %vm171 = vcmp.ge.s32.totalorder %v170, 0
        %vm172 = vcmp.lt.s32.totalorder %v170, 512
        %vm173 = vmand %vm171, %vm172
        %v174 = vsel %vm173, %v166, -inf
        %v175 = vsel %vm173, %v167, -inf
        %v176 = vsel %vm173, %v168, -inf
        %v177 = vsel %vm173, %v169, -inf
        %v178 = vmax.f32 %v174, %v175
        %v179 = vmax.f32 %v176, %v177
        %v180 = vmax.f32 %v178, %v179
        %v185 = vlaneseq
        %v186 = vshrl.u32 %v185, 7
        %v187 = vsub.s32 0, %v186
        %v188 = vrot.slane %v166, %v187
        %v189 = vlaneseq
        %v190 = vshrl.u32 %v189, 7
        %v191 = vsub.s32 1, %v190
        %v192 = vrot.slane %v166, %v191
        %v193 = vlaneseq
        %v194 = vshrl.u32 %v193, 7
        %v195 = vsub.s32 2, %v194
        %v196 = vrot.slane %v166, %v195
        %v197 = vlaneseq
        %v198 = vshrl.u32 %v197, 7
        %v199 = vsub.s32 3, %v198
        %v200 = vrot.slane %v166, %v199
        %v201 = vlaneseq
        %v202 = vshrl.u32 %v201, 7
        %v203 = vsub.s32 0, %v202
        %v204 = vrot.slane %v167, %v203
        %v205 = vlaneseq
        %v206 = vshrl.u32 %v205, 7
        %v207 = vsub.s32 1, %v206
        %v208 = vrot.slane %v167, %v207
        %v209 = vlaneseq
        %v210 = vshrl.u32 %v209, 7
        %v211 = vsub.s32 2, %v210
        %v212 = vrot.slane %v167, %v211
        %v213 = vlaneseq
        %v214 = vshrl.u32 %v213, 7
        %v215 = vsub.s32 3, %v214
        %v216 = vrot.slane %v167, %v215
        %v217 = vlaneseq
        %v218 = vshrl.u32 %v217, 7
        %v219 = vsub.s32 0, %v218
        %v220 = vrot.slane %v168, %v219
        %v221 = vlaneseq
        %v222 = vshrl.u32 %v221, 7
        %v223 = vsub.s32 1, %v222
        %v224 = vrot.slane %v168, %v223
        %v225 = vlaneseq
        %v226 = vshrl.u32 %v225, 7
        %v227 = vsub.s32 2, %v226
        %v228 = vrot.slane %v168, %v227
        %v229 = vlaneseq
        %v230 = vshrl.u32 %v229, 7
        %v231 = vsub.s32 3, %v230
        %v232 = vrot.slane %v168, %v231
        %v233 = vlaneseq
        %v234 = vshrl.u32 %v233, 7
        %v235 = vsub.s32 0, %v234
        %v236 = vrot.slane %v169, %v235
        %v237 = vlaneseq
        %v238 = vshrl.u32 %v237, 7
        %v239 = vsub.s32 1, %v238
        %v240 = vrot.slane %v169, %v239
        %v241 = vlaneseq
        %v242 = vshrl.u32 %v241, 7
        %v243 = vsub.s32 2, %v242
        %v244 = vrot.slane %v169, %v243
        %v245 = vlaneseq
        %v246 = vshrl.u32 %v245, 7
        %v247 = vsub.s32 3, %v246
        %v248 = vrot.slane %v169, %v247
        %vm265 = vcmask 1040384
        %v266 = vsel %vm265, %v188, 0.0
        %v267 = vsel %vm265, %v204, 0.0
        %v268 = vadd.f32 %v266, %v267
        %v269 = vsel %vm265, %v220, 0.0
        %v270 = vadd.f32 %v268, %v269
        %v271 = vsel %vm265, %v236, 0.0
        %v272 = vadd.f32 %v270, %v271
        %v273 = vsel %vm265, %v192, 0.0
        %v274 = vsel %vm265, %v208, 0.0
        %v275 = vadd.f32 %v273, %v274
        %v276 = vsel %vm265, %v224, 0.0
        %v277 = vadd.f32 %v275, %v276
        %v278 = vsel %vm265, %v240, 0.0
        %v279 = vadd.f32 %v277, %v278
        %v280 = vsel %vm265, %v196, 0.0
        %v281 = vsel %vm265, %v212, 0.0
        %v282 = vadd.f32 %v280, %v281
        %v283 = vsel %vm265, %v228, 0.0
        %v284 = vadd.f32 %v282, %v283
        %v285 = vsel %vm265, %v244, 0.0
        %v286 = vadd.f32 %v284, %v285
        %v287 = vsel %vm265, %v200, 0.0
        %v288 = vsel %vm265, %v216, 0.0
        %v289 = vadd.f32 %v287, %v288
        %v290 = vsel %vm265, %v232, 0.0
        %v291 = vadd.f32 %v289, %v290
        %v292 = vsel %vm265, %v248, 0.0
        %v293 = vadd.f32 %v291, %v292
        %p294 = scmp.eq.s32.totalorder %s25, 0
        // Predicated region
        $region29: #{tpu_custom_call.1} parent=23 // pred_check
          %p295 = pneg %p294
        $region30: #{tpu_custom_call.1} parent=23 // pred_check_branch
          %297 = sbr.rel (%p295) target = $region32
        $region31: #{tpu_custom_call.1} parent=23 // pred_region
          %298 = vst.msk [vmem:[%s164] sm:$0xf] %vm173, %v180
          %v303 = vcombine.low %v272, %v279
          %v304 = vcombine.low %v286, %v293
          %v306 = vunpack.c.l.s4 1966171168
          %v307 = vunpack.c.0.s8 %v306
          %v308 = vlaneseq
          %v309 = vshrl.u32 %v308, 7
          %v310 = vsub.s32 %v307, %v309
          %v311 = vrot.slane %v303, %v310
          %v313 = vunpack.c.l.s4 1966171168
          %v314 = vunpack.c.0.s8 %v313
          %v315 = vlaneseq
          %v316 = vshrl.u32 %v315, 7
          %v317 = vsub.s32 %v314, %v316
          %v318 = vrot.slane %v304, %v317
          %v319 = vcombine.low %v311, %v318
          %v321 = vunpack.c.l.s4 1966171168
          %v322 = vunpack.c.0.s8 %v321
          %v323 = vlaneseq
          %v324 = vshrl.u32 %v323, 7
          %v325 = vsub.s32 %v322, %v324
          %v326 = vrot.slane %v319, %v325
          %s328 = scalar_lea.vmem %s164, 4 [#allocation5]
          %329 = vst.msk [vmem:[%s328] sm:$0xf] %vm173, %v326
        $region32: #{tpu_custom_call.1} parent=23 // pred_fallthru
          _
        %p330 = scmp.gt.s32.totalorder %s25, 0
        // Predicated region
        $region33: #{tpu_custom_call.1} parent=23 // pred_check
          %p331 = pneg %p330
        $region34: #{tpu_custom_call.1} parent=23 // pred_check_branch
          %333 = sbr.rel (%p331) target = $region36
        $region35: #{tpu_custom_call.1} parent=23 // pred_region
          %v334 = vld [vmem:[%s164] sm:$0xf]
          %v335 = vmax.f32 %v334, %v180
          %336 = vst.msk [vmem:[%s164] sm:$0xf] %vm173, %v335
          %s337 = scalar_lea.vmem %s164, 4 [#allocation5]
          %v338 = vld [vmem:[%s337] sm:$0xf]
          %v343 = vcombine.low %v272, %v279
          %v344 = vcombine.low %v286, %v293
          %v346 = vunpack.c.l.s4 1966171168
          %v347 = vunpack.c.0.s8 %v346
          %v348 = vlaneseq
          %v349 = vshrl.u32 %v348, 7
          %v350 = vsub.s32 %v347, %v349
          %v351 = vrot.slane %v343, %v350
          %v353 = vunpack.c.l.s4 1966171168
          %v354 = vunpack.c.0.s8 %v353
          %v355 = vlaneseq
          %v356 = vshrl.u32 %v355, 7
          %v357 = vsub.s32 %v354, %v356
          %v358 = vrot.slane %v344, %v357
          %v359 = vcombine.low %v351, %v358
          %v361 = vunpack.c.l.s4 1966171168
          %v362 = vunpack.c.0.s8 %v361
          %v363 = vlaneseq
          %v364 = vshrl.u32 %v363, 7
          %v365 = vsub.s32 %v362, %v364
          %v366 = vrot.slane %v359, %v365
          %v368 = vadd.f32 %v338, %v366
          %369 = vst.msk [vmem:[%s337] sm:$0xf] %vm173, %v368
        $region36: #{tpu_custom_call.1} parent=23 // pred_fallthru
          _
        // Predicated region
        $region37: #{tpu_custom_call.1} parent=23 // pred_check
          %p370 = pneg %p294
        $region38: #{tpu_custom_call.1} parent=23 // pred_check_branch
          %372 = sbr.rel (%p370) target = $region40
        $region39: #{tpu_custom_call.1} parent=23 // pred_region
          %s373 = scalar_lea.vmem %s164, 4 [#allocation5]
          %v374 = vld [vmem:[%s373] sm:$0xf]
          %v375 = vmul.f32 %v374, 0.25
          %376 = vst.msk [vmem:[%s373] sm:$0xf] %vm173, %v375
        $region40: #{tpu_custom_call.1} parent=23 // pred_fallthru
          _
        %s377 = sand.u32 %s77, 1
        %s378 = scalar_lea.sflag [#allocation4], %s377
        %s379 = sand.u32 %s77, 1
        %s380 = smul.addr %s379, 8
        %s381 = scalar_lea.vmem [#allocation5], %s380
        // Predicated region
        $region41: #{tpu_custom_call.1} parent=23 // pred_check
          %p382 = pneg %p87
        $region42: #{tpu_custom_call.1} parent=23 // pred_check_branch
          %384 = sbr.rel (%p382) target = $region44
        $region43: #{tpu_custom_call.1} parent=23 // pred_region
          %s386 = ssub.s32 128, 128
          %387 = vsyncadd %s378, %s386
          %s388 = smul.addr %s24, 4
          %s389 = smul.addr %s23, 8
          %s390 = sadd.s32 %s388, %s389
          %s391 = smul.addr %s390, 16
          %s392 = scalar_lea.hbm %s1, %s391
          %s393 = sshll.u32 %s381, 4
          %s394 = int_to_ptr.vmem [resolvable:$true] %s393
          %399 = dma.vmem_to_hbm [thread:$0]  %s394, 128, %s392, %s378, 64, 64, 4
        $region44: #{tpu_custom_call.1} parent=23 // pred_fallthru
          _
      $region24: #{tpu_custom_call.1} parent=5 // pred_fallthru
        _
      %p400 = scmp.le.s32.totalorder 2, %s13
      // Predicated region
      $region45: #{tpu_custom_call.1} parent=5 // pred_check
        %p401 = pneg %p400
      $region46: #{tpu_custom_call.1} parent=5 // pred_check_branch
        %403 = sbr.rel (%p401) target = $region48
      $region47: #{tpu_custom_call.1} parent=5 // pred_region
        %s404 = ssub.s32 %s13, 2
        // Predicated region
        $region49: #{tpu_custom_call.1} parent=47 // pred_check
          %p405 = pneg %p93
        $region50: #{tpu_custom_call.1} parent=47 // pred_check_branch
          %407 = sbr.rel (%p405) target = $region52
        $region51: #{tpu_custom_call.1} parent=47 // pred_region
          %s408 = sand.u32 %s78, 1
          %s409 = scalar_lea.sflag [#allocation4], %s408
          %s410 = sand.u32 %s78, 1
          %s411 = smul.addr %s410, 8
          %s412 = scalar_lea.vmem [#allocation5], %s411
          %413 = dma.done %s409, 128
        $region52: #{tpu_custom_call.1} parent=47 // pred_fallthru
          _
      $region48: #{tpu_custom_call.1} parent=5 // pred_fallthru
        _
    $region6: #{tpu_custom_call.1} parent=1 // loop_footer
      %s17 = sadd.s32 1, %s13
    $region7: #{tpu_custom_call.1} parent=1 // loop_footer_branch
      %12 = sbr.rel target = $region3
    $region8: #{tpu_custom_call.1} parent=1 // loop_exit
      _
    %414 = vsyncpa [#allocation3], 1
    %s415 = scalar_lea.sflag [#allocation3], 1
    %416 = vsyncpa %s415, 1
    %417 = vsyncpa [#allocation4], 1
    %s418 = scalar_lea.sflag [#allocation4], 1
    %419 = vsyncpa %s418, 1

</llo_original>
